<compile_context>
chip_gen: v5e
topology: v5e:2x2
jax: 0.10.0
libtpu: 0.0.40
codegen_flags: <defaults>
</compile_context>

<pallas_src>
import functools

import jax
import jax.numpy as jnp
from jax import lax
from jax.experimental import pallas as pl
from jax.experimental.pallas import tpu as pltpu


def _round_up(x, m):
    return (x + m - 1) // m * m


def _supcon_kernel(anchor_ref, contrast_t_ref, a_gid_ref, c_gid_ref, msum_ref,
                   out_ref, m_sc, s_sc, p_sc, *,
                   temperature, base_temperature, nc_valid, logit_bound):
    """One (row-tile, col-tile) step of the SupCon forward pass."""
    j = pl.program_id(1)
    neg_inf = jnp.float32(-jnp.inf)

    @pl.when(j == 0)
    def _init():
        if logit_bound is None:
            m_sc[...] = jnp.full_like(m_sc, -jnp.inf)
        else:
            m_sc[...] = jnp.full_like(m_sc, logit_bound)
        s_sc[...] = jnp.zeros_like(s_sc)
        p_sc[...] = jnp.zeros_like(p_sc)

    # logits = (A @ C^T) / T on the MXU with f32 accumulation; 1/T is applied
    # to the f32 result so bf16 inputs are not pre-rounded by the scale.
    logits = jnp.dot(anchor_ref[...], contrast_t_ref[...],
                     preferred_element_type=jnp.float32)
    logits = logits * jnp.float32(1.0 / temperature)            # [tm, tn]
    tm, tn = logits.shape

    # On-chip masks (no O(N^2) HBM mask):
    #   denom_mask: non-self AND in-bounds (padded columns excluded)
    #   pos       : same group id AND denom_mask
    row0 = pl.program_id(0) * tm
    col0 = j * tn
    g_row = row0 + lax.broadcasted_iota(jnp.int32, (tm, tn), 0)
    g_col = col0 + lax.broadcasted_iota(jnp.int32, (tm, tn), 1)
    denom_mask = jnp.logical_and(g_row != g_col, g_col < nc_valid)
    pos = jnp.logical_and(a_gid_ref[...] == c_gid_ref[...], denom_mask)

    # Positive numerator: sum(mask * logits).  The stability shift cancels
    # here, so no shifted copy of the logits is needed for the numerator.
    p_sc[...] += jnp.sum(jnp.where(pos, logits, 0.0), axis=1, keepdims=True)

    if logit_bound is None:
        # Online log-sum-exp over non-self, in-bounds columns.
        chunk_max = jnp.max(jnp.where(denom_mask, logits, neg_inf),
                            axis=1, keepdims=True)
        m_new = jnp.maximum(m_sc[...], chunk_max)
        m_safe = jnp.where(m_new == neg_inf, 0.0, m_new)        # avoid inf-inf
        scale = jnp.exp(m_sc[...] - m_safe)
        chunk_sum = jnp.sum(jnp.where(denom_mask, jnp.exp(logits - m_safe), 0.0),
                            axis=1, keepdims=True)
        s_sc[...] = s_sc[...] * scale + chunk_sum
        m_sc[...] = m_new
    else:
        # L2-normalized features: |logits| <= 1/T, skip the running-max pass.
        chunk_sum = jnp.sum(
            jnp.where(denom_mask, jnp.exp(logits - jnp.float32(logit_bound)), 0.0),
            axis=1, keepdims=True)
        s_sc[...] += chunk_sum

    @pl.when(j == pl.num_programs(1) - 1)
    def _finalize():
        msum = msum_ref[...]                     # positives per row (precomputed)
        lse = m_sc[...] + jnp.log(s_sc[...])
        mean_log_prob_pos = p_sc[...] / msum - lse   # exact divide (small count)
        # Rows with no positive pair (or padded rows) contribute 0, not NaN.
        mean_log_prob_pos = jnp.where(msum > 0.0, mean_log_prob_pos, 0.0)
        out_ref[...] = (-(temperature / base_temperature)
                        * mean_log_prob_pos).astype(out_ref.dtype)


def _single_buffered_spec(block_shape, index_map):
    """BlockSpec with single buffering (constant index -> 2 buffers waste VMEM)."""
    try:
        return pl.BlockSpec(block_shape, index_map, pipeline_mode=pl.Buffered(1))
    except Exception:  # older jax without pipeline_mode / Buffered
        return pl.BlockSpec(block_shape, index_map)


def _supcon_plain_jax(features, base_mask, *, temperature, contrast_mode,
                      base_temperature):
    """Pure-JAX path mirroring the PyTorch code (used for explicit-mask input
    and as the reference in the self-test)."""
    bsz, n_views, d = features.shape
    contrast_feature = jnp.transpose(features, (1, 0, 2)).reshape(n_views * bsz, d)
    if contrast_mode == 'one':
        anchor_feature, anchor_count = features[:, 0], 1
    elif contrast_mode == 'all':
        anchor_feature, anchor_count = contrast_feature, n_views
    else:
        raise ValueError('Unknown mode: {}'.format(contrast_mode))
    logits = (anchor_feature @ contrast_feature.T) / temperature
    logits = logits - jnp.max(logits, axis=1, keepdims=True)
    mask = jnp.tile(base_mask.astype(jnp.float32), (anchor_count, n_views))
    n = bsz * anchor_count
    logits_mask = 1.0 - (jnp.arange(n)[:, None] ==
                         jnp.arange(bsz * n_views)[None, :]).astype(jnp.float32)
    mask = mask * logits_mask
    exp_logits = jnp.exp(logits) * logits_mask
    log_prob = logits - jnp.log(exp_logits.sum(1, keepdims=True))
    mean_log_prob_pos = (mask * log_prob).sum(1) / mask.sum(1)
    loss = -(temperature / base_temperature) * mean_log_prob_pos
    return loss.reshape(anchor_count, bsz).mean()


def supcon_loss(features, labels=None, mask=None, *, temperature=0.07,
                contrast_mode='all', base_temperature=0.07,
                block_rows=256, block_cols=None, normalized_features=False):
    """JAX/Pallas equivalent of SupConLoss.forward (returns a scalar loss)."""
    if features.ndim < 3:
        raise ValueError('`features` needs to be [bsz, n_views, ...], '
                         'at least 3 dimensions are required')
    if features.ndim > 3:
        features = features.reshape(features.shape[0], features.shape[1], -1)
    bsz, n_views, d = features.shape

    if labels is not None and mask is not None:
        raise ValueError('Cannot define both `labels` and `mask`')
    if mask is not None:
        # TODO(synk): an arbitrary (possibly asymmetric) user-supplied mask is
        # not expressible as on-chip group-id equality; plain-JAX path instead.
        return _supcon_plain_jax(features, mask, temperature=temperature,
                                 contrast_mode=contrast_mode,
                                 base_temperature=base_temperature)

    if labels is None:
        group = jnp.arange(bsz, dtype=jnp.int32)          # SimCLR: eye(bsz) mask
    else:
        labels = jnp.asarray(labels).reshape(-1).astype(jnp.int32)
        if labels.shape[0] != bsz:
            raise ValueError('Num of labels does not match num of features')
        group = labels

    contrast_count = n_views
    # torch.cat(torch.unbind(features, dim=1), dim=0) == transpose + reshape
    contrast_feature = jnp.transpose(features, (1, 0, 2)).reshape(n_views * bsz, d)
    if contrast_mode == 'one':
        anchor_feature, anchor_count = features[:, 0], 1
    elif contrast_mode == 'all':
        anchor_feature, anchor_count = contrast_feature, contrast_count
    else:
        raise ValueError('Unknown mode: {}'.format(contrast_mode))

    na = bsz * anchor_count
    nc = bsz * contrast_count
    itemsize = jnp.dtype(features.dtype).itemsize
    sub = 8 if itemsize >= 4 else (16 if itemsize == 2 else 32)

    # mask.sum(1) (positives per anchor row), precomputed from a label
    # histogram: row r -> contrast_count * #{same label} - 1 (the self column).
    counts = jnp.sum(group[:, None] == group[None, :], axis=1).astype(jnp.float32)
    mask_sum = jnp.tile(counts * contrast_count - 1.0, anchor_count)      # [na]

    anchor_group = jnp.tile(group, anchor_count)           # [na]
    contrast_group = jnp.tile(group, contrast_count)       # [nc]

    # --- Tile selection -----------------------------------------------------
    # Row tile: keep >= 2 tiles when possible so the "parallel" axis can feed
    # both TensorCores on v7x; bf16 rounds to 16 sublanes, f32 to 8.
    block_rows = max(sub, _round_up(block_rows, sub))
    tm = min(block_rows, max(sub, _round_up(-(-na // 2), sub)))
    d_p = _round_up(d, sub)

    # Generation-aware VMEM budget (v7x: 64 MiB physical, v5e/v6e: 128 MiB).
    try:
        vmem_cap = int(pltpu.get_tpu_info().vmem_capacity_bytes)
    except Exception:
        vmem_cap = 64 * 1024 * 1024
    vmem_limit = max(32 << 20, min(int(vmem_cap * 0.75), 100 << 20))
    budget = int(vmem_limit * 0.8)

    def est_bytes(tm_, tn_, contrast_bufs):
        return (2 * tm_ * d_p * itemsize                        # anchor (2 bufs)
                + contrast_bufs * (d_p * tn_ * itemsize + tn_ * 4)
                + 6 * tm_ * tn_ * 4                             # live [tm,tn] temps
                + 8 * tm_ * 4)                                  # per-row blocks

    nc_128 = _round_up(nc, 128)
    if block_cols is not None:
        tn = min(_round_up(block_cols, 128), nc_128)
    elif est_bytes(tm, nc_128, 1) <= budget:
        tn = nc_128                     # whole contrast resident (v5e/v6e typical)
    else:
        tn = 128                        # stream Nc (v7x / very large batches)
        for cand in (1024, 512, 256):
            if cand <= nc_128 and est_bytes(tm, cand, 2) <= budget:
                tn = cand
                break
    nc_p = _round_up(nc, tn)
    num_col_tiles = nc_p // tn
    if num_col_tiles > 1 and tm > 128 and est_bytes(tm, tn, 2) > budget:
        tm = 128
    na_p = _round_up(na, tm)
    num_row_tiles = na_p // tm

    # --- Padding (padded data never reaches the loss: col-valid mask / slice) --
    if d_p != d:
        anchor_feature = jnp.pad(anchor_feature, ((0, 0), (0, d_p - d)))
        contrast_feature = jnp.pad(contrast_feature, ((0, 0), (0, d_p - d)))
    if na_p != na:
        anchor_feature = jnp.pad(anchor_feature, ((0, na_p - na), (0, 0)))
        anchor_group = jnp.pad(anchor_group, (0, na_p - na), constant_values=-1)
        mask_sum = jnp.pad(mask_sum, (0, na_p - na))
    if nc_p != nc:
        contrast_feature = jnp.pad(contrast_feature, ((0, nc_p - nc), (0, 0)))
        contrast_group = jnp.pad(contrast_group, (0, nc_p - nc), constant_values=-2)

    # Pre-transpose contrast to [D, Nc] so the MXU op is a clean NN matmul.
    contrast_t = jnp.transpose(contrast_feature, (1, 0))
    anchor_group = anchor_group.reshape(na_p, 1)
    contrast_group = contrast_group.reshape(1, nc_p)
    mask_sum = mask_sum.reshape(na_p, 1).astype(jnp.float32)

    # Constant-index contrast operands: single-buffer when fully resident.
    if num_col_tiles == 1:
        contrast_t_spec = _single_buffered_spec((d_p, tn), lambda i, j: (0, j))
        contrast_g_spec = _single_buffered_spec((1, tn), lambda i, j: (0, j))
    else:
        contrast_t_spec = pl.BlockSpec((d_p, tn), lambda i, j: (0, j))
        contrast_g_spec = pl.BlockSpec((1, tn), lambda i, j: (0, j))

    contrast_reads = 1 if num_col_tiles == 1 else num_row_tiles
    cost = pl.CostEstimate(
        flops=2 * na_p * nc_p * d_p,
        transcendentals=na_p * nc_p,
        bytes_accessed=(na_p * d_p * itemsize
                        + contrast_reads * d_p * nc_p * itemsize
                        + (3 * na_p + nc_p) * 4))

    kernel = functools.partial(
        _supcon_kernel,
        temperature=float(temperature),
        base_temperature=float(base_temperature),
        nc_valid=nc,
        logit_bound=(1.0 / float(temperature)) if normalized_features else None)

    per_row = pl.pallas_call(
        kernel,
        grid=(num_row_tiles, num_col_tiles),
        in_specs=[
            pl.BlockSpec((tm, d_p), lambda i, j: (i, 0)),   # anchor rows (pipelined)
            contrast_t_spec,                                # contrast^T column tile
            pl.BlockSpec((tm, 1), lambda i, j: (i, 0)),     # anchor group ids
            contrast_g_spec,                                # contrast group ids
            pl.BlockSpec((tm, 1), lambda i, j: (i, 0)),     # positives per row
        ],
        out_specs=pl.BlockSpec((tm, 1), lambda i, j: (i, 0)),
        out_shape=jax.ShapeDtypeStruct((na_p, 1), jnp.float32),
        scratch_shapes=[pltpu.VMEM((tm, 1), jnp.float32),   # running max
                        pltpu.VMEM((tm, 1), jnp.float32),   # running sum-exp
                        pltpu.VMEM((tm, 1), jnp.float32)],  # running sum(mask*logits)
        compiler_params=pltpu.CompilerParams(
            dimension_semantics=("parallel", "arbitrary"),
            vmem_limit_bytes=vmem_limit),
        cost_estimate=cost,
    )(anchor_feature, contrast_t, anchor_group, contrast_group, mask_sum)

    # loss.view(anchor_count, bsz).mean() == mean over all (real) anchor rows.
    return jnp.mean(per_row[:na, 0])


if __name__ == "__main__":
    key = jax.random.PRNGKey(0)
    k1, k2, k3, k4 = jax.random.split(key, 4)
    tol = dict(rtol=2e-3, atol=2e-3)

    # Case 1: small supervised batch (single tile, resident contrast).
    bsz, n_views, d = 4, 2, 32
    feats = jax.random.normal(k1, (bsz, n_views, d), dtype=jnp.float32)
    feats = feats / jnp.linalg.norm(feats, axis=-1, keepdims=True)
    labels = jax.random.randint(k2, (bsz,), 0, 3)
    label_mask = (labels[:, None] == labels[None, :]).astype(jnp.float32)

    loss = jax.block_until_ready(supcon_loss(feats, labels=labels))
    ref = _supcon_plain_jax(feats, label_mask, temperature=0.07,
                            contrast_mode='all', base_temperature=0.07)
    assert jnp.allclose(loss, ref, **tol), (loss, ref)

    # Fast path for L2-normalized features (skips the running-max pass).
    loss_n = jax.block_until_ready(
        supcon_loss(feats, labels=labels, normalized_features=True))
    assert jnp.allclose(loss_n, ref, **tol), (loss_n, ref)

    # Unsupervised (SimCLR) path: labels=None -> eye mask.
    loss_u = jax.block_until_ready(supcon_loss(feats))
    ref_u = _supcon_plain_jax(feats, jnp.eye(bsz, dtype=jnp.float32),
                              temperature=0.07, contrast_mode='all',
                              base_temperature=0.07)
    assert jnp.allclose(loss_u, ref_u, **tol), (loss_u, ref_u)

    # contrast_mode='one'.
    loss_o = jax.block_until_ready(
        supcon_loss(feats, labels=labels, contrast_mode='one'))
    ref_o = _supcon_plain_jax(feats, label_mask, temperature=0.07,
                              contrast_mode='one', base_temperature=0.07)
    assert jnp.allclose(loss_o, ref_o, **tol), (loss_o, ref_o)

    # Case 2: exercise Nc streaming (multi row/col tiles, padded columns,
    # online log-sum-exp accumulation).
    bsz2, nv2, d2 = 96, 2, 32
    feats2 = jax.random.normal(k3, (bsz2, nv2, d2), dtype=jnp.float32)
    feats2 = feats2 / jnp.linalg.norm(feats2, axis=-1, keepdims=True)
    labels2 = jax.random.randint(k4, (bsz2,), 0, 6)
    mask2 = (labels2[:, None] == labels2[None, :]).astype(jnp.float32)
    loss2 = jax.block_until_ready(
        supcon_loss(feats2, labels=labels2, block_cols=128))
    ref2 = _supcon_plain_jax(feats2, mask2, temperature=0.07,
                             contrast_mode='all', base_temperature=0.07)
    assert jnp.allclose(loss2, ref2, **tol), (loss2, ref2)

    print("KERNEL_OK")
</pallas_src>

<mosaic_0001>
module attributes {stable_mosaic.version = 11 : i64} {
  func.func @_supcon_kernel(%arg0: i32, %arg1: i32, %arg2: memref<8x32xf32, #tpu.memory_space<vmem>>, %arg3: memref<32x128xf32, #tpu.memory_space<vmem>>, %arg4: memref<8x1xi32, #tpu.memory_space<vmem>>, %arg5: memref<1x128xi32, #tpu.memory_space<vmem>>, %arg6: memref<8x1xf32, #tpu.memory_space<vmem>>, %arg7: memref<8x1xf32, #tpu.memory_space<vmem>>, %arg8: memref<8x1xf32, #tpu.memory_space<vmem>>, %arg9: memref<8x1xf32, #tpu.memory_space<vmem>>, %arg10: memref<8x1xf32, #tpu.memory_space<vmem>>) attributes {dimension_semantics = [#tpu.dimension_semantics<parallel>, #tpu.dimension_semantics<arbitrary>], iteration_bounds = array<i64: 1, 1>, scalar_prefetch = 0 : i64, scratch_operands = 3 : i64, tpu.core_type = #tpu.core_type<tc>, window_params = [{transform_indices = @transform_0, window_bounds = array<i64: 8, 32>}, {pipeline_mode = #tpu.pipeline_mode<synchronous>, transform_indices = @transform_1, window_bounds = array<i64: 32, 128>}, {transform_indices = @transform_2, window_bounds = array<i64: 8, 1>}, {pipeline_mode = #tpu.pipeline_mode<synchronous>, transform_indices = @transform_3, window_bounds = array<i64: 1, 128>}, {transform_indices = @transform_4, window_bounds = array<i64: 8, 1>}, {transform_indices = @transform_5, window_bounds = array<i64: 8, 1>}]} {
    %c0_i32 = arith.constant 0 : i32
    %0 = arith.cmpi eq, %arg1, %c0_i32 : i32
    %1 = arith.extui %0 : i1 to i32
    %c0_i32_0 = arith.constant 0 : i32
    %2 = arith.cmpi ne, %1, %c0_i32_0 : i32
    scf.if %2 {
      %cst_34 = arith.constant 0xFF800000 : f32
      %61 = vector.broadcast %cst_34 : f32 to vector<8x1xf32>
      %c0_35 = arith.constant 0 : index
      %c0_36 = arith.constant 0 : index
      %62 = vector.load %arg8[%c0_35, %c0_36] : memref<8x1xf32, #tpu.memory_space<vmem>>, vector<8x1xf32>
      tpu.vector_store %arg8[%c0_35, %c0_36], %61 {strides = array<i32>} : memref<8x1xf32, #tpu.memory_space<vmem>>, vector<8x1xf32>,
      %cst_37 = arith.constant 0.000000e+00 : f32
      %63 = vector.broadcast %cst_37 : f32 to vector<8x1xf32>
      %c0_38 = arith.constant 0 : index
      %c0_39 = arith.constant 0 : index
      %64 = vector.load %arg9[%c0_38, %c0_39] : memref<8x1xf32, #tpu.memory_space<vmem>>, vector<8x1xf32>
      tpu.vector_store %arg9[%c0_38, %c0_39], %63 {strides = array<i32>} : memref<8x1xf32, #tpu.memory_space<vmem>>, vector<8x1xf32>,
      %cst_40 = arith.constant 0.000000e+00 : f32
      %65 = vector.broadcast %cst_40 : f32 to vector<8x1xf32>
      %c0_41 = arith.constant 0 : index
      %c0_42 = arith.constant 0 : index
      %66 = vector.load %arg10[%c0_41, %c0_42] : memref<8x1xf32, #tpu.memory_space<vmem>>, vector<8x1xf32>
      tpu.vector_store %arg10[%c0_41, %c0_42], %65 {strides = array<i32>} : memref<8x1xf32, #tpu.memory_space<vmem>>, vector<8x1xf32>,
    } else {
    }
    %c0 = arith.constant 0 : index
    %c0_1 = arith.constant 0 : index
    %3 = vector.load %arg2[%c0, %c0_1] : memref<8x32xf32, #tpu.memory_space<vmem>>, vector<8x32xf32>
    %c0_2 = arith.constant 0 : index
    %c0_3 = arith.constant 0 : index
    %4 = vector.load %arg3[%c0_2, %c0_3] : memref<32x128xf32, #tpu.memory_space<vmem>>, vector<32x128xf32>
    %cst = arith.constant dense<0.000000e+00> : vector<8x128xf32>
    %5 = tpu.matmul %3, %4, %cst {dimension_numbers = #tpu.dot_dimension_numbers<[1], [0], [0], [1], [0, 0, 1, 1], [], []>} : vector<8x32xf32>, vector<32x128xf32>, vector<8x128xf32> -> vector<8x128xf32>
    %cst_4 = arith.constant 14.2857141 : f32
    %6 = vector.broadcast %cst_4 : f32 to vector<8x128xf32>
    %7 = arith.mulf %5, %6 : vector<8x128xf32>
    %c8_i32 = arith.constant 8 : i32
    %8 = arith.muli %arg0, %c8_i32 : i32
    %c128_i32 = arith.constant 128 : i32
    %9 = arith.muli %arg1, %c128_i32 : i32
    %10 = tpu.iota {dimensions = array<i32: 0>} : vector<8x128xi32>
    %11 = vector.broadcast %8 : i32 to vector<8x128xi32>
    %12 = arith.addi %11, %10 : vector<8x128xi32>
    %13 = tpu.iota {dimensions = array<i32: 1>} : vector<8x128xi32>
    %14 = vector.broadcast %9 : i32 to vector<8x128xi32>
    %15 = arith.addi %14, %13 : vector<8x128xi32>
    %16 = arith.cmpi ne, %12, %15 : vector<8x128xi32>
    %c8_i32_5 = arith.constant 8 : i32
    %17 = vector.broadcast %c8_i32_5 : i32 to vector<8x128xi32>
    %18 = arith.cmpi slt, %15, %17 : vector<8x128xi32>
    %19 = arith.andi %16, %18 : vector<8x128xi1>
    %c0_6 = arith.constant 0 : index
    %c0_7 = arith.constant 0 : index
    %20 = vector.load %arg4[%c0_6, %c0_7] : memref<8x1xi32, #tpu.memory_space<vmem>>, vector<8x1xi32>
    %c0_8 = arith.constant 0 : index
    %c0_9 = arith.constant 0 : index
    %21 = vector.load %arg5[%c0_8, %c0_9] : memref<1x128xi32, #tpu.memory_space<vmem>>, vector<1x128xi32>
    %22 = vector.broadcast %20 : vector<8x1xi32> to vector<8x128xi32>
    %23 = vector.broadcast %21 : vector<1x128xi32> to vector<8x128xi32>
    %24 = arith.cmpi eq, %22, %23 : vector<8x128xi32>
    %25 = arith.andi %24, %19 : vector<8x128xi1>
    %c0_10 = arith.constant 0 : index
    %c0_11 = arith.constant 0 : index
    %26 = vector.load %arg10[%c0_10, %c0_11] : memref<8x1xf32, #tpu.memory_space<vmem>>, vector<8x1xf32>
    %cst_12 = arith.constant 0.000000e+00 : f32
    %27 = vector.broadcast %cst_12 : f32 to vector<8x128xf32>
    %28 = arith.select %25, %7, %27 : vector<8x128xi1>, vector<8x128xf32>
    %cst_13 = arith.constant dense<0.000000e+00> : vector<8xf32>
    %29 = vector.multi_reduction <add>, %28, %cst_13 [1] : vector<8x128xf32> to vector<8xf32>
    %30 = vector.shape_cast %29 : vector<8xf32> to vector<8x1xf32>
    %31 = arith.addf %26, %30 : vector<8x1xf32>
    %c0_14 = arith.constant 0 : index
    %c0_15 = arith.constant 0 : index
    %32 = vector.load %arg10[%c0_14, %c0_15] : memref<8x1xf32, #tpu.memory_space<vmem>>, vector<8x1xf32>
    tpu.vector_store %arg10[%c0_14, %c0_15], %31 {strides = array<i32>} : memref<8x1xf32, #tpu.memory_space<vmem>>, vector<8x1xf32>,
    %cst_16 = arith.constant 0xFF800000 : f32
    %33 = vector.broadcast %cst_16 : f32 to vector<8x128xf32>
    %34 = arith.select %19, %7, %33 : vector<8x128xi1>, vector<8x128xf32>
    %cst_17 = arith.constant dense<0xFF800000> : vector<8xf32>
    %35 = vector.multi_reduction <maximumf>, %34, %cst_17 [1] : vector<8x128xf32> to vector<8xf32>
    %36 = vector.shape_cast %35 : vector<8xf32> to vector<8x1xf32>
    %c0_18 = arith.constant 0 : index
    %c0_19 = arith.constant 0 : index
    %37 = vector.load %arg8[%c0_18, %c0_19] : memref<8x1xf32, #tpu.memory_space<vmem>>, vector<8x1xf32>
    %38 = arith.maximumf %37, %36 : vector<8x1xf32>
    %cst_20 = arith.constant 0xFF800000 : f32
    %39 = vector.broadcast %cst_20 : f32 to vector<8x1xf32>
    %40 = arith.cmpf oeq, %38, %39 : vector<8x1xf32>
    %cst_21 = arith.constant 0.000000e+00 : f32
    %41 = vector.broadcast %cst_21 : f32 to vector<8x1xf32>
    %42 = arith.select %40, %41, %38 : vector<8x1xi1>, vector<8x1xf32>
    %c0_22 = arith.constant 0 : index
    %c0_23 = arith.constant 0 : index
    %43 = vector.load %arg8[%c0_22, %c0_23] : memref<8x1xf32, #tpu.memory_space<vmem>>, vector<8x1xf32>
    %44 = arith.subf %43, %42 : vector<8x1xf32>
    %45 = math.exp %44 : vector<8x1xf32>
    %46 = vector.broadcast %42 : vector<8x1xf32> to vector<8x128xf32>
    %47 = arith.subf %7, %46 : vector<8x128xf32>
    %48 = math.exp %47 : vector<8x128xf32>
    %cst_24 = arith.constant 0.000000e+00 : f32
    %49 = vector.broadcast %cst_24 : f32 to vector<8x128xf32>
    %50 = arith.select %19, %48, %49 : vector<8x128xi1>, vector<8x128xf32>
    %cst_25 = arith.constant dense<0.000000e+00> : vector<8xf32>
    %51 = vector.multi_reduction <add>, %50, %cst_25 [1] : vector<8x128xf32> to vector<8xf32>
    %52 = vector.shape_cast %51 : vector<8xf32> to vector<8x1xf32>
    %c0_26 = arith.constant 0 : index
    %c0_27 = arith.constant 0 : index
    %53 = vector.load %arg9[%c0_26, %c0_27] : memref<8x1xf32, #tpu.memory_space<vmem>>, vector<8x1xf32>
    %54 = arith.mulf %53, %45 : vector<8x1xf32>
    %55 = arith.addf %54, %52 : vector<8x1xf32>
    %c0_28 = arith.constant 0 : index
    %c0_29 = arith.constant 0 : index
    %56 = vector.load %arg9[%c0_28, %c0_29] : memref<8x1xf32, #tpu.memory_space<vmem>>, vector<8x1xf32>
    tpu.vector_store %arg9[%c0_28, %c0_29], %55 {strides = array<i32>} : memref<8x1xf32, #tpu.memory_space<vmem>>, vector<8x1xf32>,
    %c0_30 = arith.constant 0 : index
    %c0_31 = arith.constant 0 : index
    %57 = vector.load %arg8[%c0_30, %c0_31] : memref<8x1xf32, #tpu.memory_space<vmem>>, vector<8x1xf32>
    tpu.vector_store %arg8[%c0_30, %c0_31], %38 {strides = array<i32>} : memref<8x1xf32, #tpu.memory_space<vmem>>, vector<8x1xf32>,
    %c0_i32_32 = arith.constant 0 : i32
    %58 = arith.cmpi eq, %arg1, %c0_i32_32 : i32
    %59 = arith.extui %58 : i1 to i32
    %c0_i32_33 = arith.constant 0 : i32
    %60 = arith.cmpi ne, %59, %c0_i32_33 : i32
    scf.if %60 {
      %c0_34 = arith.constant 0 : index
      %c0_35 = arith.constant 0 : index
      %61 = vector.load %arg6[%c0_34, %c0_35] : memref<8x1xf32, #tpu.memory_space<vmem>>, vector<8x1xf32>
      %c0_36 = arith.constant 0 : index
      %c0_37 = arith.constant 0 : index
      %62 = vector.load %arg8[%c0_36, %c0_37] : memref<8x1xf32, #tpu.memory_space<vmem>>, vector<8x1xf32>
      %c0_38 = arith.constant 0 : index
      %c0_39 = arith.constant 0 : index
      %63 = vector.load %arg9[%c0_38, %c0_39] : memref<8x1xf32, #tpu.memory_space<vmem>>, vector<8x1xf32>
      %64 = math.log %63 : vector<8x1xf32>
      %65 = arith.addf %62, %64 : vector<8x1xf32>
      %c0_40 = arith.constant 0 : index
      %c0_41 = arith.constant 0 : index
      %66 = vector.load %arg10[%c0_40, %c0_41] : memref<8x1xf32, #tpu.memory_space<vmem>>, vector<8x1xf32>
      %67 = arith.divf %66, %61 : vector<8x1xf32>
      %68 = arith.subf %67, %65 : vector<8x1xf32>
      %cst_42 = arith.constant 0.000000e+00 : f32
      %69 = vector.broadcast %cst_42 : f32 to vector<8x1xf32>
      %70 = arith.cmpf ogt, %61, %69 : vector<8x1xf32>
      %cst_43 = arith.constant 0.000000e+00 : f32
      %71 = vector.broadcast %cst_43 : f32 to vector<8x1xf32>
      %72 = arith.select %70, %68, %71 : vector<8x1xi1>, vector<8x1xf32>
      %cst_44 = arith.constant -1.000000e+00 : f32
      %73 = vector.broadcast %cst_44 : f32 to vector<8x1xf32>
      %74 = arith.mulf %73, %72 : vector<8x1xf32>
      %c0_45 = arith.constant 0 : index
      %c0_46 = arith.constant 0 : index
      %75 = vector.load %arg7[%c0_45, %c0_46] : memref<8x1xf32, #tpu.memory_space<vmem>>, vector<8x1xf32>
      tpu.vector_store %arg7[%c0_45, %c0_46], %74 {strides = array<i32>} : memref<8x1xf32, #tpu.memory_space<vmem>>, vector<8x1xf32>,
    } else {
    }
    return
  }
  func.func @transform_0(%arg0: i32, %arg1: i32) -> (i32, i32) {
    %c0_i32 = arith.constant 0 : i32
    %c0_i32_0 = arith.constant 0 : i32
    return %arg0, %c0_i32 : i32, i32
  }
  func.func @transform_1(%arg0: i32, %arg1: i32) -> (i32, i32) {
    %c0_i32 = arith.constant 0 : i32
    %c0_i32_0 = arith.constant 0 : i32
    return %c0_i32, %arg1 : i32, i32
  }
  func.func @transform_2(%arg0: i32, %arg1: i32) -> (i32, i32) {
    %c0_i32 = arith.constant 0 : i32
    %c0_i32_0 = arith.constant 0 : i32
    return %arg0, %c0_i32 : i32, i32
  }
  func.func @transform_3(%arg0: i32, %arg1: i32) -> (i32, i32) {
    %c0_i32 = arith.constant 0 : i32
    %c0_i32_0 = arith.constant 0 : i32
    return %c0_i32, %arg1 : i32, i32
  }
  func.func @transform_4(%arg0: i32, %arg1: i32) -> (i32, i32) {
    %c0_i32 = arith.constant 0 : i32
    %c0_i32_0 = arith.constant 0 : i32
    return %arg0, %c0_i32 : i32, i32
  }
  func.func @transform_5(%arg0: i32, %arg1: i32) -> (i32, i32) {
    %c0_i32 = arith.constant 0 : i32
    %c0_i32_0 = arith.constant 0 : i32
    return %arg0, %c0_i32 : i32, i32
  }
}

</mosaic_0001>

<llo_original>
// kernel: tpu_custom_call.1
$region0: #{tpu_custom_call.1}
  #allocation0 [shape = 'u32[]', space=smem, size = 0x4, offset = 0x4, fixed_abs, tag = 'smem constant byte address 0x4 - core index']
  #allocation1 [shape = 'u32[72,128]{1,0:T(1,128)}', space=vmem, size = 0x9000, scoped, tag = 'internal scratch']
  #allocation2 [shape = 'f32[8,1]{1,0:T(8,128)}', space=vmem, size = 0x1000, scoped, tag = 'scratch operand']
  #allocation3 [shape = 'f32[8,1]{1,0:T(8,128)}', space=vmem, size = 0x1000, scoped, tag = 'scratch operand']
  #allocation4 [shape = 'f32[8,1]{1,0:T(8,128)}', space=vmem, size = 0x1000, scoped, tag = 'scratch operand']
  %s0 = inlined_call_operand.vmem [shape: f32[8,32], index: 0, kind: input, shape index: {}]
  %s1 = inlined_call_operand.hbm [shape: f32[32,128], index: 1, kind: input, shape index: {}]
  %s2 = inlined_call_operand.vmem [shape: s32[8,1], index: 2, kind: input, shape index: {}]
  %s3 = inlined_call_operand.vmem [shape: s32[1,128], index: 3, kind: input, shape index: {}]
  %s4 = inlined_call_operand.vmem [shape: f32[8,1], index: 4, kind: input, shape index: {}]
  %s5 = inlined_call_operand.vmem [shape: f32[8,1], index: 5, kind: output, shape index: {}]
  %s6 = sld [smem:[#allocation0]]
  $region42: #{tpu_custom_call.1} parent=0
    _
  %s8 = ssub.s32 1, %s6
  %s9 = scalar_select 0, %s8, %s6
  $region1: #{tpu_custom_call.1} parent=0
    #allocation5 [shape = 'u8[16384]{0}', space=vmem, size = 0x4000, scoped, tag = 'input window, operand 1, single buffered']
    #allocation6 [shape = 's32[1]{0}', space=sflag, size = 0x4, scoped, tag = 'scoped memory for tpu_custom_call.1']
    %10 = vsyncpa [#allocation6], 0
    // Predicated region
    $region2: #{tpu_custom_call.1} parent=1 // pred_check
      _
    $region3: #{tpu_custom_call.1} parent=1 // pred_check_branch
      %12 = sbr.rel (0) target = $region5
    $region4: #{tpu_custom_call.1} parent=1 // pred_region
      _
    $region5: #{tpu_custom_call.1} parent=1 // pred_fallthru
      _
    // Predicated region
    $region6: #{tpu_custom_call.1} parent=1 // pred_check
      _
    $region7: #{tpu_custom_call.1} parent=1 // pred_check_branch
      %14 = sbr.rel (0) target = $region9
    $region8: #{tpu_custom_call.1} parent=1 // pred_region
      %16 = vsyncadd [#allocation6], 0
      %s17 = sshll.u32 %s1, 4
      %s18 = int_to_ptr.hbm [resolvable:$true] %s17
      %s19 = sshll.u32 [#allocation5], 4
      %s20 = int_to_ptr.vmem [resolvable:$true] %s19
      %25 = dma.hbm_to_vmem [thread:$0]  %s18, 512, %s20, [#allocation6], 128, 128, 8
    $region9: #{tpu_custom_call.1} parent=1 // pred_fallthru
      _
    // Predicated region
    $region10: #{tpu_custom_call.1} parent=1 // pred_check
      _
    $region11: #{tpu_custom_call.1} parent=1 // pred_check_branch
      %27 = sbr.rel (0) target = $region13
    $region12: #{tpu_custom_call.1} parent=1 // pred_region
      _
    $region13: #{tpu_custom_call.1} parent=1 // pred_fallthru
      _
    // Predicated region
    $region14: #{tpu_custom_call.1} parent=1 // pred_check
      _
    $region15: #{tpu_custom_call.1} parent=1 // pred_check_branch
      %29 = sbr.rel (0) target = $region17
    $region16: #{tpu_custom_call.1} parent=1 // pred_region
      _
    $region17: #{tpu_custom_call.1} parent=1 // pred_fallthru
      _
    // Predicated region
    $region18: #{tpu_custom_call.1} parent=1 // pred_check
      _
    $region19: #{tpu_custom_call.1} parent=1 // pred_check_branch
      %31 = sbr.rel (0) target = $region21
    $region20: #{tpu_custom_call.1} parent=1 // pred_region
      _
    $region21: #{tpu_custom_call.1} parent=1 // pred_fallthru
      _
    // Predicated region
    $region22: #{tpu_custom_call.1} parent=1 // pred_check
      _
    $region23: #{tpu_custom_call.1} parent=1 // pred_check_branch
      %33 = sbr.rel (0) target = $region25
    $region24: #{tpu_custom_call.1} parent=1 // pred_region
      %35 = dma.done [#allocation6], 512
    $region25: #{tpu_custom_call.1} parent=1 // pred_fallthru
      _
    %p36 = scmp.eq.s32.totalorder 0, 0
    // Predicated region
    $region26: #{tpu_custom_call.1} parent=1 // pred_check
      %p37 = pneg %p36
    $region27: #{tpu_custom_call.1} parent=1 // pred_check_branch
      %39 = sbr.rel (%p37) target = $region29
    $region28: #{tpu_custom_call.1} parent=1 // pred_region
      %vm40 = vcmask 7168
      %41 = vst.msk [vmem:[#allocation2] sm:$0xff] %vm40, -inf
      %42 = vst.msk [vmem:[#allocation3] sm:$0xff] %vm40, 0.0
      %43 = vst.msk [vmem:[#allocation4] sm:$0xff] %vm40, 0.0
    $region29: #{tpu_custom_call.1} parent=1 // pred_fallthru
      _
    %v44 = vld [vmem:[%s0] sm:$0xff]
    %v45 = vld [vmem:[#allocation5] sm:$0xff]
    %v46 = vld [vmem:[#allocation5 + $0x8] sm:$0xff]
    %v47 = vld [vmem:[#allocation5 + $0x10] sm:$0xff]
    %v48 = vld [vmem:[#allocation5 + $0x18] sm:$0xff]
    %vm49 = vcmask 261120
    %v51 = vsel %vm49, %v44, 0
    %53 = vmatpush.msra.mxu0 0.0
    %54 = vmatpush.msra.mxu0 0.0
    %55 = vmatpush.msra.mxu0 0.0
    %56 = vmatpush.msra.mxu0 0.0
    %57 = vmatpush.msra.mxu0 0.0
    %58 = vmatpush.msra.mxu0 0.0
    %59 = vmatpush.msra.mxu0 0.0
    %60 = vmatpush.msra.mxu0 0.0
    %61 = vmatpush.msra.mxu0 0.0
    %62 = vmatpush.msra.mxu0 0.0
    %63 = vmatpush.msra.mxu0 0.0
    %64 = vmatpush.msra.mxu0 0.0
    %65 = vmatpush.msra.mxu0 %v48
    %66 = vmatpush.msra.mxu0 %v47
    %67 = vmatpush.msra.mxu0 %v46
    %68 = vmatpush.msra.mxu0 %v45
    %69 = vmatmul.f32.gmra.mxu0 %v51
    %v70 = vpop.f32.mrf.mxu0
    %v71 = vadd.f32 0.0, %v70
    %72 = vdwg.mxu0
    %v73 = vmul.f32 %v71, 14.285714
    %s74 = smul.u32 0, 8
    %s75 = smul.u32 0, 128
    %v76 = vlaneseq
    %v77 = vshrl.u32 %v76, 7
    %v78 = vstv %s74
    %v79 = vadd.s32 %v78, %v77
    %v80 = vlaneseq
    %v81 = vand.u32 %v80, 127
    %v82 = vstv %s75
    %v83 = vadd.s32 %v82, %v81
    %vm84 = vcmp.ne.s32.totalorder %v79, %v83
    %vm85 = vcmp.lt.s32.totalorder %v83, 8
    %vm86 = vmand %vm84, %vm85
    %v87 = vld [vmem:[%s2] sm:$0xff]
    %v88 = vld [vmem:[%s3] sm:$0x1]
    %89 = vset.pattern.permute.xlu0 0
    %90 = vperm.xlu0 %89, %v87
    %v91 = vpop.permute.xlu0 %90
    %v92 = vperm.slane %v88, 0
    %vm93 = vcmp.eq.s32.totalorder %v91, %v92
    %vm94 = vmand %vm93, %vm86
    %v95 = vld [vmem:[#allocation4] sm:$0xff]
    %v96 = vsel %vm94, %v73, 0.0
    %97 = vadd.xlane.f32.xlu0 %v96
    %v98 = vpop.xlane.xlu0 %97
    %v99 = vadd.f32 %v95, %v98
    %vm100 = vcmask 7168
    %101 = vst.msk [vmem:[#allocation4] sm:$0xff] %vm100, %v99
    %v102 = vsel %vm86, %v73, -inf
    %103 = vmax.xlane.f32.xlu0 %v102
    %v104 = vpop.xlane.xlu0 %103
    %v105 = vld [vmem:[#allocation2] sm:$0xff]
    %v106 = vmax.f32 %v105, %v104
    %vm107 = vcmp.eq.f32.partialorder %v106, -inf
    %v108 = vsel %vm107, 0.0, %v106
    %v109 = vsub.f32 %v105, %v108
    %v110 = vmul.f32 %v109, 1.442695
    %v111 = vpow.pop %v110
    %113 = vset.pattern.permute.xlu0 0
    %114 = vperm.xlu0 %113, %v108
    %v115 = vpop.permute.xlu0 %114
    %v117 = vsub.f32 %v73, %v115
    %v118 = vmul.f32 %v117, 1.442695
    %v119 = vpow.pop %v118
    %v120 = vsel %vm86, %v119, 0.0
    %121 = vadd.xlane.f32.xlu0 %v120
    %v122 = vpop.xlane.xlu0 %121
    %v123 = vld [vmem:[#allocation3] sm:$0xff]
    %v124 = vmul.f32 %v123, %v111
    %v125 = vadd.f32 %v124, %v122
    %126 = vst.msk [vmem:[#allocation3] sm:$0xff] %vm100, %v125
    %127 = vst.msk [vmem:[#allocation2] sm:$0xff] %vm100, %v106
    // Predicated region
    $region30: #{tpu_custom_call.1} parent=1 // pred_check
      %p128 = pneg %p36
    $region31: #{tpu_custom_call.1} parent=1 // pred_check_branch
      %130 = sbr.rel (%p128) target = $region33
    $region32: #{tpu_custom_call.1} parent=1 // pred_region
      %v131 = vld [vmem:[%s4] sm:$0xff]
      %v132 = vld [vmem:[#allocation2] sm:$0xff]
      %v133 = vld [vmem:[#allocation3] sm:$0xff]
      %v134 = vlog2.pop %v133
      %v135 = vmul.f32 %v134, 0.6931472
      %v136 = vadd.f32 %v132, %v135
      %v137 = vld [vmem:[#allocation4] sm:$0xff]
      %v138 = vrcp.pop %v131
      %v139 = vmul.f32 %v131, %v138
      %v140 = vsub.f32 1.0, %v139
      %v141 = vmul.f32 %v138, %v140
      %v142 = vadd.f32 %v138, %v141
      %vm143 = vweird.f32 %v131
      %vm144 = vweird.f32 %v138
      %vm145 = vmor %vm143, %vm144
      %v146 = vsel %vm145, %v138, %v142
      %v147 = vand.u32 2147483647, %v131
      %vm148 = vcmp.eq.f32.partialorder %v147, 8.507059e+37
      %v149 = vand.u32 %v131, 2147483648
      %v150 = vor.u32 1.1754944e-38, %v149
      %v151 = vsel %vm148, %v150, %v146
      %v152 = vmul.f32 %v137, %v151
      %v153 = vsub.f32 %v152, %v136
      %vm154 = vcmp.gt.f32.partialorder %v131, 0.0
      %v155 = vsel %vm154, %v153, 0.0
      %v156 = vmul.f32 %v155, -1.0
      %157 = vst.msk [vmem:[%s5] sm:$0xff] %vm100, %v156
    $region33: #{tpu_custom_call.1} parent=1 // pred_fallthru
      _
    // Predicated region
    $region34: #{tpu_custom_call.1} parent=1 // pred_check
      _
    $region35: #{tpu_custom_call.1} parent=1 // pred_check_branch
      %159 = sbr.rel (0) target = $region37
    $region36: #{tpu_custom_call.1} parent=1 // pred_region
      _
    $region37: #{tpu_custom_call.1} parent=1 // pred_fallthru
      _
    // Predicated region
    $region38: #{tpu_custom_call.1} parent=1 // pred_check
      _
    $region39: #{tpu_custom_call.1} parent=1 // pred_check_branch
      %161 = sbr.rel (0) target = $region41
    $region40: #{tpu_custom_call.1} parent=1 // pred_region
      _
    $region41: #{tpu_custom_call.1} parent=1 // pred_fallthru
      _
    %162 = vsyncpa [#allocation6], 1

</llo_original>
